<compile_context>
chip_gen: v5e
topology: v5e:2x2
jax: 0.10.0
libtpu: 0.0.40
codegen_flags: <defaults>
</compile_context>

<pallas_src>
import functools

import jax
import jax.numpy as jnp
from jax import lax
from jax.experimental import pallas as pl
from jax.experimental.pallas import tpu as pltpu


def _round_up(x, m):
    return (x + m - 1) // m * m


def _vmem_capacity_bytes():
    """Per-core VMEM capacity; conservative (v7x) default if the query fails."""
    try:
        cap = int(pltpu.get_tpu_info().vmem_capacity_bytes)
        if cap > 0:
            return cap
    except Exception:
        pass
    return 64 * 1024 * 1024


def _choose_tn(B, N, K, Cin, Cout_pad, buf_budget):
    """Largest node tile whose per-tile VMEM footprint fits the pipelined budget."""
    per_node = (K * 2 * Cin * 6          # f32 gather slab + transient bf16 copy
                + K * Cout_pad * 4       # f32 matmul result before the K-max
                + 2 * Cout_pad * 4)      # double-buffered f32 output block
    fixed = (2 * 2 * N * Cin * 4         # two (N, Cin) f32 tables, double-buffered
             + 2 * 2 * Cin * Cout_pad * 2  # stacked bf16 weight, double-buffered
             + 2 * Cout_pad * 4)         # bias
    tn = (buf_budget - fixed) // max(per_node, 1)
    tn = max(8, min(tn, N))
    if tn >= N:
        tn = N
        if B == 1 and N >= 16:           # keep both v7x TensorCores busy
            tn = _round_up((N + 1) // 2, 8)
    else:
        tn = max(8, (tn // 8) * 8)       # sublane-aligned tile
    return min(tn, N)


def _edgeconv_kernel(idx_ref, tabi_ref, tabj_ref, w_ref, b_ref, out_ref, slab_ref,
                     *, B, N, K, TN, Cin):
    # idx_ref : SMEM (2*B, N*K) int32; rows [0,B) = edge_index[0] (x_j indices),
    #           rows [B,2B) = edge_index[1] (x_i indices), flattened as n*K + k.
    # tabi_ref, tabj_ref : VMEM (N, Cin) f32 feature tables (batch dim squeezed).
    # w_ref   : VMEM (2*Cin, Cout_pad) bf16 = [(Wi - Wj)^T ; Wj^T], zero-padded cols.
    # b_ref   : VMEM (1, Cout_pad) f32 bias, zero-padded.
    # out_ref : VMEM (TN, Cout_pad) f32.
    # slab_ref: VMEM scratch (K*TN, 2*Cin) f32 gathered edge features.
    b = pl.program_id(0)
    n0 = pl.program_id(1) * TN

    # ---- in-kernel gather: SMEM indices -> dynamic row slices of the VMEM table.
    def gather_node(n, carry):
        node = jnp.minimum(n0 + n, N - 1)          # clamp the ragged last tile
        base = node * K
        for k in range(K):                         # static unroll over neighbours
            dj = idx_ref[b, base + k]              # edge_index[0] -> x_j
            di = idx_ref[B + b, base + k]          # edge_index[1] -> x_i
            r = k * TN + n
            slab_ref[pl.ds(r, 1), 0:Cin] = tabi_ref[pl.ds(di, 1), :]
            slab_ref[pl.ds(r, 1), Cin:2 * Cin] = tabj_ref[pl.ds(dj, 1), :]
        return carry

    lax.fori_loop(0, TN, gather_node, 0)

    # ---- one MXU pass: (K*TN, 2*Cin) @ (2*Cin, Cout_pad), f32 accumulation.
    h = jnp.dot(slab_ref[...].astype(jnp.bfloat16), w_ref[...],
                preferred_element_type=jnp.float32)

    # ---- running max over the K neighbour slices (sublane-aligned static slices).
    m = h[0:TN]
    for k in range(1, K):
        m = jnp.maximum(m, h[k * TN:(k + 1) * TN])

    # bias + ReLU after the max is exact (both monotone nondecreasing).
    out_ref[...] = jnp.maximum(m + b_ref[...], 0.0)


def edge_conv2d(x, edge_index, weight, bias, y=None, tile_n=None):
    """x: (B, Cin, N, 1) f32; edge_index: (2, B, N, K) int; weight: (Cout, 2*Cin, 1, 1);
    bias: (Cout,); optional y: (B, Cin, N, 1). Returns (B, Cout, N, 1) f32."""
    B, Cin, N, _ = x.shape
    K = edge_index.shape[-1]
    Cout = weight.shape[0]
    Cout_pad = _round_up(Cout, 128)

    # Channel-last per-batch feature tables (read from HBM once per batch).
    tab_i = jnp.swapaxes(x[..., 0], 1, 2).astype(jnp.float32)              # (B, N, Cin)
    tab_j = tab_i if y is None else jnp.swapaxes(y[..., 0], 1, 2).astype(jnp.float32)

    # Flattened edge indices -> SMEM via scalar prefetch (long axis last).
    idx = edge_index.astype(jnp.int32).reshape(2 * B, N * K)

    # Split + stack the 1x1-conv weight:
    #   W @ cat([x_i, x_j - x_i]) == x_i @ (Wi - Wj)^T + x_j @ Wj^T
    # -> single (2*Cin, Cout_pad) RHS for the fused-contraction matmul.
    w2d = weight[:, :, 0, 0]                                               # (Cout, 2*Cin)
    w_i, w_j = w2d[:, :Cin], w2d[:, Cin:]
    wcat = jnp.zeros((2 * Cin, Cout_pad), jnp.bfloat16)
    wcat = wcat.at[:Cin, :Cout].set((w_i - w_j).T.astype(jnp.bfloat16))
    wcat = wcat.at[Cin:, :Cout].set(w_j.T.astype(jnp.bfloat16))
    b_pad = jnp.zeros((1, Cout_pad), jnp.float32).at[0, :Cout].set(
        bias.astype(jnp.float32))

    # Generation-aware VMEM budget / tile size.
    cap = _vmem_capacity_bytes()
    buf_budget = (12 << 20) if cap >= (96 << 20) else (8 << 20)
    vmem_limit = int(min(cap * 3 // 4, 96 << 20))
    TN = tile_n if tile_n is not None else _choose_tn(B, N, K, Cin, Cout_pad, buf_budget)
    grid = (B, pl.cdiv(N, TN))

    kernel = functools.partial(_edgeconv_kernel, B=B, N=N, K=K, TN=TN, Cin=Cin)
    # TODO(synk): when the caller can guarantee the DGCNN identity center-index
    # (edge_index[1][b,n,k] == n), the x_i half could be gathered/multiplied once
    # per node instead of once per edge (K x fewer gathers and MXU rows).

    out = pl.pallas_call(
        kernel,
        out_shape=jax.ShapeDtypeStruct((B, N, Cout_pad), jnp.float32),
        grid_spec=pltpu.PrefetchScalarGridSpec(
            num_scalar_prefetch=1,
            grid=grid,
            in_specs=[
                pl.BlockSpec((None, N, Cin), lambda b, n, idx: (b, 0, 0)),      # tab_i
                pl.BlockSpec((None, N, Cin), lambda b, n, idx: (b, 0, 0)),      # tab_j
                pl.BlockSpec((2 * Cin, Cout_pad), lambda b, n, idx: (0, 0)),    # wcat
                pl.BlockSpec((1, Cout_pad), lambda b, n, idx: (0, 0)),          # bias
            ],
            out_specs=pl.BlockSpec((None, TN, Cout_pad), lambda b, n, idx: (b, n, 0)),
            scratch_shapes=[pltpu.VMEM((K * TN, 2 * Cin), jnp.float32)],
        ),
        compiler_params=pltpu.CompilerParams(
            dimension_semantics=("parallel", "parallel"),
            vmem_limit_bytes=vmem_limit,
        ),
    )(idx, tab_i, tab_j, wcat, b_pad)

    out = out[:, :, :Cout]                                   # drop lane padding
    # TODO(synk): emit channel-first (B, Cout_pad, N) directly from the kernel
    # (in-kernel XLU transpose) to drop this wrapper-side transpose round trip.
    return jnp.transpose(out, (0, 2, 1))[..., None]          # (B, Cout, N, 1)


def _reference(x, edge_index, weight, bias, y=None):
    """Pure-JAX f32 reference matching the PyTorch forward exactly."""
    xs = x[..., 0]
    ys = xs if y is None else y[..., 0]

    def gather(feat, idxb):
        return feat[:, idxb]

    x_i = jax.vmap(gather)(xs, edge_index[1])
    x_j = jax.vmap(gather)(ys, edge_index[0])
    feat = jnp.concatenate([x_i, x_j - x_i], axis=1)         # (B, 2C, N, K)
    w2d = weight[:, :, 0, 0]                                 # (Cout, 2C)
    h = jnp.einsum("oc,bcnk->bonk", w2d, feat) + bias[None, :, None, None]
    h = jnp.maximum(h, 0.0)
    return jnp.max(h, axis=-1, keepdims=True)                # (B, Cout, N, 1)


if __name__ == "__main__":
    key = jax.random.PRNGKey(0)

    # ---- test 1: small canonical shape (single tile per batch) -----------------
    B, Cin, N, K, Cout = 2, 4, 16, 8, 8
    k1, k2, k3, k4 = jax.random.split(key, 4)
    x = jax.random.normal(k1, (B, Cin, N, 1), dtype=jnp.float32)
    edge_index = jax.random.randint(k2, (2, B, N, K), 0, N, dtype=jnp.int32)
    fan_in = 2 * Cin
    bound = 1.0 / (fan_in ** 0.5)
    weight = jax.random.uniform(k3, (Cout, 2 * Cin, 1, 1), jnp.float32, -bound, bound)
    bias = jax.random.uniform(k4, (Cout,), jnp.float32, -bound, bound)

    out = jax.block_until_ready(edge_conv2d(x, edge_index, weight, bias))
    ref = jax.block_until_ready(_reference(x, edge_index, weight, bias))
    assert out.shape == (B, Cout, N, 1), out.shape
    # bf16 MXU inputs (f32 accumulation) -> loosened tolerance vs f32 reference.
    assert jnp.allclose(out, ref, atol=2e-2, rtol=2e-2), "test1 mismatch vs reference"

    # ---- test 2: multi-tile grid, ragged last tile, y != None, odd K -----------
    B2, Cin2, N2, K2, Cout2 = 1, 8, 40, 5, 20
    k5, k6, k7, k8, k9 = jax.random.split(jax.random.PRNGKey(1), 5)
    x2 = jax.random.normal(k5, (B2, Cin2, N2, 1), dtype=jnp.float32)
    y2 = jax.random.normal(k9, (B2, Cin2, N2, 1), dtype=jnp.float32)
    ei2 = jax.random.randint(k6, (2, B2, N2, K2), 0, N2, dtype=jnp.int32)
    bound2 = 1.0 / ((2 * Cin2) ** 0.5)
    w2 = jax.random.uniform(k7, (Cout2, 2 * Cin2, 1, 1), jnp.float32, -bound2, bound2)
    b2 = jax.random.uniform(k8, (Cout2,), jnp.float32, -bound2, bound2)

    out2 = jax.block_until_ready(edge_conv2d(x2, ei2, w2, b2, y=y2, tile_n=16))
    ref2 = jax.block_until_ready(_reference(x2, ei2, w2, b2, y=y2))
    assert out2.shape == (B2, Cout2, N2, 1), out2.shape
    assert jnp.allclose(out2, ref2, atol=2e-2, rtol=2e-2), "test2 mismatch vs reference"

    print("KERNEL_OK")
</pallas_src>

<mosaic_0001>
module attributes {stable_mosaic.version = 11 : i64} {
  func.func @_edgeconv_kernel(%arg0: i32, %arg1: i32, %arg2: memref<4x128xi32, #tpu.memory_space<smem>>, %arg3: memref<1x16x4xf32, #tpu.memory_space<vmem>>, %arg4: memref<1x16x4xf32, #tpu.memory_space<vmem>>, %arg5: memref<8x128xbf16, #tpu.memory_space<vmem>>, %arg6: memref<1x128xf32, #tpu.memory_space<vmem>>, %arg7: memref<1x16x128xf32, #tpu.memory_space<vmem>>, %arg8: memref<128x8xf32, #tpu.memory_space<vmem>>) attributes {dimension_semantics = [#tpu.dimension_semantics<parallel>, #tpu.dimension_semantics<parallel>], iteration_bounds = array<i64: 2, 1>, scalar_prefetch = 1 : i64, scratch_operands = 1 : i64, tpu.core_type = #tpu.core_type<tc>, window_params = [{transform_indices = @transform_0, window_bounds = array<i64: 1, 16, 4>}, {transform_indices = @transform_1, window_bounds = array<i64: 1, 16, 4>}, {pipeline_mode = #tpu.pipeline_mode<synchronous>, transform_indices = @transform_2, window_bounds = array<i64: 8, 128>}, {pipeline_mode = #tpu.pipeline_mode<synchronous>, transform_indices = @transform_3, window_bounds = array<i64: 1, 128>}, {transform_indices = @transform_4, window_bounds = array<i64: 1, 16, 128>}]} {
    %c16_i32 = arith.constant 16 : i32
    %0 = arith.muli %arg1, %c16_i32 : i32
    %c0_i32 = arith.constant 0 : i32
    %c16_i32_0 = arith.constant 16 : i32
    %1 = arith.addi %c0_i32, %c16_i32_0 : i32
    %c1_i32 = arith.constant 1 : i32
    scf.for %arg9 = %c0_i32 to %1 step %c1_i32  : i32 {
      %29 = arith.addi %0, %arg9 : i32
      %c15_i32 = arith.constant 15 : i32
      %30 = arith.minsi %29, %c15_i32 : i32
      %c8_i32 = arith.constant 8 : i32
      %31 = arith.muli %30, %c8_i32 : i32
      %c0_i32_11 = arith.constant 0 : i32
      %32 = arith.addi %31, %c0_i32_11 : i32
      %33 = arith.index_cast %arg0 : i32 to index
      %34 = arith.index_cast %32 : i32 to index
      %35 = memref.load %arg2[%33, %34] : memref<4x128xi32, #tpu.memory_space<smem>>
      %c2_i32 = arith.constant 2 : i32
      %36 = arith.addi %c2_i32, %arg0 : i32
      %c0_i32_12 = arith.constant 0 : i32
      %37 = arith.addi %31, %c0_i32_12 : i32
      %38 = arith.index_cast %36 : i32 to index
      %39 = arith.index_cast %37 : i32 to index
      %40 = memref.load %arg2[%38, %39] : memref<4x128xi32, #tpu.memory_space<smem>>
      %c0_i32_13 = arith.constant 0 : i32
      %41 = arith.addi %c0_i32_13, %arg9 : i32
      %c0_14 = arith.constant 0 : index
      %42 = arith.index_cast %40 : i32 to index
      %c0_15 = arith.constant 0 : index
      %43 = vector.load %arg3[%c0_14, %42, %c0_15] : memref<1x16x4xf32, #tpu.memory_space<vmem>>, vector<1x1x4xf32>
      %44 = vector.shape_cast %43 : vector<1x1x4xf32> to vector<1x4xf32>
      %45 = arith.index_cast %41 : i32 to index
      %c0_16 = arith.constant 0 : index
      %46 = vector.load %arg8[%45, %c0_16] : memref<128x8xf32, #tpu.memory_space<vmem>>, vector<1x4xf32>
      tpu.vector_store %arg8[%45, %c0_16], %44 {strides = array<i32>} : memref<128x8xf32, #tpu.memory_space<vmem>>, vector<1x4xf32>,
      %c0_17 = arith.constant 0 : index
      %47 = arith.index_cast %35 : i32 to index
      %c0_18 = arith.constant 0 : index
      %48 = vector.load %arg4[%c0_17, %47, %c0_18] : memref<1x16x4xf32, #tpu.memory_space<vmem>>, vector<1x1x4xf32>
      %49 = vector.shape_cast %48 : vector<1x1x4xf32> to vector<1x4xf32>
      %50 = arith.index_cast %41 : i32 to index
      %c4 = arith.constant 4 : index
      %51 = vector.load %arg8[%50, %c4] : memref<128x8xf32, #tpu.memory_space<vmem>>, vector<1x4xf32>
      tpu.vector_store %arg8[%50, %c4], %49 {strides = array<i32>} : memref<128x8xf32, #tpu.memory_space<vmem>>, vector<1x4xf32>,
      %c1_i32_19 = arith.constant 1 : i32
      %52 = arith.addi %31, %c1_i32_19 : i32
      %53 = arith.index_cast %arg0 : i32 to index
      %54 = arith.index_cast %52 : i32 to index
      %55 = memref.load %arg2[%53, %54] : memref<4x128xi32, #tpu.memory_space<smem>>
      %c2_i32_20 = arith.constant 2 : i32
      %56 = arith.addi %c2_i32_20, %arg0 : i32
      %c1_i32_21 = arith.constant 1 : i32
      %57 = arith.addi %31, %c1_i32_21 : i32
      %58 = arith.index_cast %56 : i32 to index
      %59 = arith.index_cast %57 : i32 to index
      %60 = memref.load %arg2[%58, %59] : memref<4x128xi32, #tpu.memory_space<smem>>
      %c16_i32_22 = arith.constant 16 : i32
      %61 = arith.addi %c16_i32_22, %arg9 : i32
      %c0_23 = arith.constant 0 : index
      %62 = arith.index_cast %60 : i32 to index
      %c0_24 = arith.constant 0 : index
      %63 = vector.load %arg3[%c0_23, %62, %c0_24] : memref<1x16x4xf32, #tpu.memory_space<vmem>>, vector<1x1x4xf32>
      %64 = vector.shape_cast %63 : vector<1x1x4xf32> to vector<1x4xf32>
      %65 = arith.index_cast %61 : i32 to index
      %c0_25 = arith.constant 0 : index
      %66 = vector.load %arg8[%65, %c0_25] : memref<128x8xf32, #tpu.memory_space<vmem>>, vector<1x4xf32>
      tpu.vector_store %arg8[%65, %c0_25], %64 {strides = array<i32>} : memref<128x8xf32, #tpu.memory_space<vmem>>, vector<1x4xf32>,
      %c0_26 = arith.constant 0 : index
      %67 = arith.index_cast %55 : i32 to index
      %c0_27 = arith.constant 0 : index
      %68 = vector.load %arg4[%c0_26, %67, %c0_27] : memref<1x16x4xf32, #tpu.memory_space<vmem>>, vector<1x1x4xf32>
      %69 = vector.shape_cast %68 : vector<1x1x4xf32> to vector<1x4xf32>
      %70 = arith.index_cast %61 : i32 to index
      %c4_28 = arith.constant 4 : index
      %71 = vector.load %arg8[%70, %c4_28] : memref<128x8xf32, #tpu.memory_space<vmem>>, vector<1x4xf32>
      tpu.vector_store %arg8[%70, %c4_28], %69 {strides = array<i32>} : memref<128x8xf32, #tpu.memory_space<vmem>>, vector<1x4xf32>,
      %c2_i32_29 = arith.constant 2 : i32
      %72 = arith.addi %31, %c2_i32_29 : i32
      %73 = arith.index_cast %arg0 : i32 to index
      %74 = arith.index_cast %72 : i32 to index
      %75 = memref.load %arg2[%73, %74] : memref<4x128xi32, #tpu.memory_space<smem>>
      %c2_i32_30 = arith.constant 2 : i32
      %76 = arith.addi %c2_i32_30, %arg0 : i32
      %c2_i32_31 = arith.constant 2 : i32
      %77 = arith.addi %31, %c2_i32_31 : i32
      %78 = arith.index_cast %76 : i32 to index
      %79 = arith.index_cast %77 : i32 to index
      %80 = memref.load %arg2[%78, %79] : memref<4x128xi32, #tpu.memory_space<smem>>
      %c32_i32 = arith.constant 32 : i32
      %81 = arith.addi %c32_i32, %arg9 : i32
      %c0_32 = arith.constant 0 : index
      %82 = arith.index_cast %80 : i32 to index
      %c0_33 = arith.constant 0 : index
      %83 = vector.load %arg3[%c0_32, %82, %c0_33] : memref<1x16x4xf32, #tpu.memory_space<vmem>>, vector<1x1x4xf32>
      %84 = vector.shape_cast %83 : vector<1x1x4xf32> to vector<1x4xf32>
      %85 = arith.index_cast %81 : i32 to index
      %c0_34 = arith.constant 0 : index
      %86 = vector.load %arg8[%85, %c0_34] : memref<128x8xf32, #tpu.memory_space<vmem>>, vector<1x4xf32>
      tpu.vector_store %arg8[%85, %c0_34], %84 {strides = array<i32>} : memref<128x8xf32, #tpu.memory_space<vmem>>, vector<1x4xf32>,
      %c0_35 = arith.constant 0 : index
      %87 = arith.index_cast %75 : i32 to index
      %c0_36 = arith.constant 0 : index
      %88 = vector.load %arg4[%c0_35, %87, %c0_36] : memref<1x16x4xf32, #tpu.memory_space<vmem>>, vector<1x1x4xf32>
      %89 = vector.shape_cast %88 : vector<1x1x4xf32> to vector<1x4xf32>
      %90 = arith.index_cast %81 : i32 to index
      %c4_37 = arith.constant 4 : index
      %91 = vector.load %arg8[%90, %c4_37] : memref<128x8xf32, #tpu.memory_space<vmem>>, vector<1x4xf32>
      tpu.vector_store %arg8[%90, %c4_37], %89 {strides = array<i32>} : memref<128x8xf32, #tpu.memory_space<vmem>>, vector<1x4xf32>,
      %c3_i32 = arith.constant 3 : i32
      %92 = arith.addi %31, %c3_i32 : i32
      %93 = arith.index_cast %arg0 : i32 to index
      %94 = arith.index_cast %92 : i32 to index
      %95 = memref.load %arg2[%93, %94] : memref<4x128xi32, #tpu.memory_space<smem>>
      %c2_i32_38 = arith.constant 2 : i32
      %96 = arith.addi %c2_i32_38, %arg0 : i32
      %c3_i32_39 = arith.constant 3 : i32
      %97 = arith.addi %31, %c3_i32_39 : i32
      %98 = arith.index_cast %96 : i32 to index
      %99 = arith.index_cast %97 : i32 to index
      %100 = memref.load %arg2[%98, %99] : memref<4x128xi32, #tpu.memory_space<smem>>
      %c48_i32 = arith.constant 48 : i32
      %101 = arith.addi %c48_i32, %arg9 : i32
      %c0_40 = arith.constant 0 : index
      %102 = arith.index_cast %100 : i32 to index
      %c0_41 = arith.constant 0 : index
      %103 = vector.load %arg3[%c0_40, %102, %c0_41] : memref<1x16x4xf32, #tpu.memory_space<vmem>>, vector<1x1x4xf32>
      %104 = vector.shape_cast %103 : vector<1x1x4xf32> to vector<1x4xf32>
      %105 = arith.index_cast %101 : i32 to index
      %c0_42 = arith.constant 0 : index
      %106 = vector.load %arg8[%105, %c0_42] : memref<128x8xf32, #tpu.memory_space<vmem>>, vector<1x4xf32>
      tpu.vector_store %arg8[%105, %c0_42], %104 {strides = array<i32>} : memref<128x8xf32, #tpu.memory_space<vmem>>, vector<1x4xf32>,
      %c0_43 = arith.constant 0 : index
      %107 = arith.index_cast %95 : i32 to index
      %c0_44 = arith.constant 0 : index
      %108 = vector.load %arg4[%c0_43, %107, %c0_44] : memref<1x16x4xf32, #tpu.memory_space<vmem>>, vector<1x1x4xf32>
      %109 = vector.shape_cast %108 : vector<1x1x4xf32> to vector<1x4xf32>
      %110 = arith.index_cast %101 : i32 to index
      %c4_45 = arith.constant 4 : index
      %111 = vector.load %arg8[%110, %c4_45] : memref<128x8xf32, #tpu.memory_space<vmem>>, vector<1x4xf32>
      tpu.vector_store %arg8[%110, %c4_45], %109 {strides = array<i32>} : memref<128x8xf32, #tpu.memory_space<vmem>>, vector<1x4xf32>,
      %c4_i32 = arith.constant 4 : i32
      %112 = arith.addi %31, %c4_i32 : i32
      %113 = arith.index_cast %arg0 : i32 to index
      %114 = arith.index_cast %112 : i32 to index
      %115 = memref.load %arg2[%113, %114] : memref<4x128xi32, #tpu.memory_space<smem>>
      %c2_i32_46 = arith.constant 2 : i32
      %116 = arith.addi %c2_i32_46, %arg0 : i32
      %c4_i32_47 = arith.constant 4 : i32
      %117 = arith.addi %31, %c4_i32_47 : i32
      %118 = arith.index_cast %116 : i32 to index
      %119 = arith.index_cast %117 : i32 to index
      %120 = memref.load %arg2[%118, %119] : memref<4x128xi32, #tpu.memory_space<smem>>
      %c64_i32 = arith.constant 64 : i32
      %121 = arith.addi %c64_i32, %arg9 : i32
      %c0_48 = arith.constant 0 : index
      %122 = arith.index_cast %120 : i32 to index
      %c0_49 = arith.constant 0 : index
      %123 = vector.load %arg3[%c0_48, %122, %c0_49] : memref<1x16x4xf32, #tpu.memory_space<vmem>>, vector<1x1x4xf32>
      %124 = vector.shape_cast %123 : vector<1x1x4xf32> to vector<1x4xf32>
      %125 = arith.index_cast %121 : i32 to index
      %c0_50 = arith.constant 0 : index
      %126 = vector.load %arg8[%125, %c0_50] : memref<128x8xf32, #tpu.memory_space<vmem>>, vector<1x4xf32>
      tpu.vector_store %arg8[%125, %c0_50], %124 {strides = array<i32>} : memref<128x8xf32, #tpu.memory_space<vmem>>, vector<1x4xf32>,
      %c0_51 = arith.constant 0 : index
      %127 = arith.index_cast %115 : i32 to index
      %c0_52 = arith.constant 0 : index
      %128 = vector.load %arg4[%c0_51, %127, %c0_52] : memref<1x16x4xf32, #tpu.memory_space<vmem>>, vector<1x1x4xf32>
      %129 = vector.shape_cast %128 : vector<1x1x4xf32> to vector<1x4xf32>
      %130 = arith.index_cast %121 : i32 to index
      %c4_53 = arith.constant 4 : index
      %131 = vector.load %arg8[%130, %c4_53] : memref<128x8xf32, #tpu.memory_space<vmem>>, vector<1x4xf32>
      tpu.vector_store %arg8[%130, %c4_53], %129 {strides = array<i32>} : memref<128x8xf32, #tpu.memory_space<vmem>>, vector<1x4xf32>,
      %c5_i32 = arith.constant 5 : i32
      %132 = arith.addi %31, %c5_i32 : i32
      %133 = arith.index_cast %arg0 : i32 to index
      %134 = arith.index_cast %132 : i32 to index
      %135 = memref.load %arg2[%133, %134] : memref<4x128xi32, #tpu.memory_space<smem>>
      %c2_i32_54 = arith.constant 2 : i32
      %136 = arith.addi %c2_i32_54, %arg0 : i32
      %c5_i32_55 = arith.constant 5 : i32
      %137 = arith.addi %31, %c5_i32_55 : i32
      %138 = arith.index_cast %136 : i32 to index
      %139 = arith.index_cast %137 : i32 to index
      %140 = memref.load %arg2[%138, %139] : memref<4x128xi32, #tpu.memory_space<smem>>
      %c80_i32 = arith.constant 80 : i32
      %141 = arith.addi %c80_i32, %arg9 : i32
      %c0_56 = arith.constant 0 : index
      %142 = arith.index_cast %140 : i32 to index
      %c0_57 = arith.constant 0 : index
      %143 = vector.load %arg3[%c0_56, %142, %c0_57] : memref<1x16x4xf32, #tpu.memory_space<vmem>>, vector<1x1x4xf32>
      %144 = vector.shape_cast %143 : vector<1x1x4xf32> to vector<1x4xf32>
      %145 = arith.index_cast %141 : i32 to index
      %c0_58 = arith.constant 0 : index
      %146 = vector.load %arg8[%145, %c0_58] : memref<128x8xf32, #tpu.memory_space<vmem>>, vector<1x4xf32>
      tpu.vector_store %arg8[%145, %c0_58], %144 {strides = array<i32>} : memref<128x8xf32, #tpu.memory_space<vmem>>, vector<1x4xf32>,
      %c0_59 = arith.constant 0 : index
      %147 = arith.index_cast %135 : i32 to index
      %c0_60 = arith.constant 0 : index
      %148 = vector.load %arg4[%c0_59, %147, %c0_60] : memref<1x16x4xf32, #tpu.memory_space<vmem>>, vector<1x1x4xf32>
      %149 = vector.shape_cast %148 : vector<1x1x4xf32> to vector<1x4xf32>
      %150 = arith.index_cast %141 : i32 to index
      %c4_61 = arith.constant 4 : index
      %151 = vector.load %arg8[%150, %c4_61] : memref<128x8xf32, #tpu.memory_space<vmem>>, vector<1x4xf32>
      tpu.vector_store %arg8[%150, %c4_61], %149 {strides = array<i32>} : memref<128x8xf32, #tpu.memory_space<vmem>>, vector<1x4xf32>,
      %c6_i32 = arith.constant 6 : i32
      %152 = arith.addi %31, %c6_i32 : i32
      %153 = arith.index_cast %arg0 : i32 to index
      %154 = arith.index_cast %152 : i32 to index
      %155 = memref.load %arg2[%153, %154] : memref<4x128xi32, #tpu.memory_space<smem>>
      %c2_i32_62 = arith.constant 2 : i32
      %156 = arith.addi %c2_i32_62, %arg0 : i32
      %c6_i32_63 = arith.constant 6 : i32
      %157 = arith.addi %31, %c6_i32_63 : i32
      %158 = arith.index_cast %156 : i32 to index
      %159 = arith.index_cast %157 : i32 to index
      %160 = memref.load %arg2[%158, %159] : memref<4x128xi32, #tpu.memory_space<smem>>
      %c96_i32 = arith.constant 96 : i32
      %161 = arith.addi %c96_i32, %arg9 : i32
      %c0_64 = arith.constant 0 : index
      %162 = arith.index_cast %160 : i32 to index
      %c0_65 = arith.constant 0 : index
      %163 = vector.load %arg3[%c0_64, %162, %c0_65] : memref<1x16x4xf32, #tpu.memory_space<vmem>>, vector<1x1x4xf32>
      %164 = vector.shape_cast %163 : vector<1x1x4xf32> to vector<1x4xf32>
      %165 = arith.index_cast %161 : i32 to index
      %c0_66 = arith.constant 0 : index
      %166 = vector.load %arg8[%165, %c0_66] : memref<128x8xf32, #tpu.memory_space<vmem>>, vector<1x4xf32>
      tpu.vector_store %arg8[%165, %c0_66], %164 {strides = array<i32>} : memref<128x8xf32, #tpu.memory_space<vmem>>, vector<1x4xf32>,
      %c0_67 = arith.constant 0 : index
      %167 = arith.index_cast %155 : i32 to index
      %c0_68 = arith.constant 0 : index
      %168 = vector.load %arg4[%c0_67, %167, %c0_68] : memref<1x16x4xf32, #tpu.memory_space<vmem>>, vector<1x1x4xf32>
      %169 = vector.shape_cast %168 : vector<1x1x4xf32> to vector<1x4xf32>
      %170 = arith.index_cast %161 : i32 to index
      %c4_69 = arith.constant 4 : index
      %171 = vector.load %arg8[%170, %c4_69] : memref<128x8xf32, #tpu.memory_space<vmem>>, vector<1x4xf32>
      tpu.vector_store %arg8[%170, %c4_69], %169 {strides = array<i32>} : memref<128x8xf32, #tpu.memory_space<vmem>>, vector<1x4xf32>,
      %c7_i32 = arith.constant 7 : i32
      %172 = arith.addi %31, %c7_i32 : i32
      %173 = arith.index_cast %arg0 : i32 to index
      %174 = arith.index_cast %172 : i32 to index
      %175 = memref.load %arg2[%173, %174] : memref<4x128xi32, #tpu.memory_space<smem>>
      %c2_i32_70 = arith.constant 2 : i32
      %176 = arith.addi %c2_i32_70, %arg0 : i32
      %c7_i32_71 = arith.constant 7 : i32
      %177 = arith.addi %31, %c7_i32_71 : i32
      %178 = arith.index_cast %176 : i32 to index
      %179 = arith.index_cast %177 : i32 to index
      %180 = memref.load %arg2[%178, %179] : memref<4x128xi32, #tpu.memory_space<smem>>
      %c112_i32 = arith.constant 112 : i32
      %181 = arith.addi %c112_i32, %arg9 : i32
      %c0_72 = arith.constant 0 : index
      %182 = arith.index_cast %180 : i32 to index
      %c0_73 = arith.constant 0 : index
      %183 = vector.load %arg3[%c0_72, %182, %c0_73] : memref<1x16x4xf32, #tpu.memory_space<vmem>>, vector<1x1x4xf32>
      %184 = vector.shape_cast %183 : vector<1x1x4xf32> to vector<1x4xf32>
      %185 = arith.index_cast %181 : i32 to index
      %c0_74 = arith.constant 0 : index
      %186 = vector.load %arg8[%185, %c0_74] : memref<128x8xf32, #tpu.memory_space<vmem>>, vector<1x4xf32>
      tpu.vector_store %arg8[%185, %c0_74], %184 {strides = array<i32>} : memref<128x8xf32, #tpu.memory_space<vmem>>, vector<1x4xf32>,
      %c0_75 = arith.constant 0 : index
      %187 = arith.index_cast %175 : i32 to index
      %c0_76 = arith.constant 0 : index
      %188 = vector.load %arg4[%c0_75, %187, %c0_76] : memref<1x16x4xf32, #tpu.memory_space<vmem>>, vector<1x1x4xf32>
      %189 = vector.shape_cast %188 : vector<1x1x4xf32> to vector<1x4xf32>
      %190 = arith.index_cast %181 : i32 to index
      %c4_77 = arith.constant 4 : index
      %191 = vector.load %arg8[%190, %c4_77] : memref<128x8xf32, #tpu.memory_space<vmem>>, vector<1x4xf32>
      tpu.vector_store %arg8[%190, %c4_77], %189 {strides = array<i32>} : memref<128x8xf32, #tpu.memory_space<vmem>>, vector<1x4xf32>,
    }
    %c16_i32_1 = arith.constant 16 : i32
    %c0 = arith.constant 0 : index
    %c0_2 = arith.constant 0 : index
    %2 = vector.load %arg8[%c0, %c0_2] : memref<128x8xf32, #tpu.memory_space<vmem>>, vector<128x8xf32>
    %3 = arith.truncf %2 : vector<128x8xf32> to vector<128x8xbf16>
    %c0_3 = arith.constant 0 : index
    %c0_4 = arith.constant 0 : index
    %4 = vector.load %arg5[%c0_3, %c0_4] : memref<8x128xbf16, #tpu.memory_space<vmem>>, vector<8x128xbf16>
    %cst = arith.constant dense<0.000000e+00> : vector<128x128xf32>
    %5 = tpu.matmul %3, %4, %cst {dimension_numbers = #tpu.dot_dimension_numbers<[1], [0], [0], [1], [0, 0, 1, 1], [], []>} : vector<128x8xbf16>, vector<8x128xbf16>, vector<128x128xf32> -> vector<128x128xf32>
    %6 = vector.extract_strided_slice %5 {offsets = [0, 0], sizes = [16, 128], strides = [1, 1]} : vector<128x128xf32> to vector<16x128xf32>
    %7 = vector.extract_strided_slice %5 {offsets = [16, 0], sizes = [16, 128], strides = [1, 1]} : vector<128x128xf32> to vector<16x128xf32>
    %8 = arith.maximumf %6, %7 : vector<16x128xf32>
    %9 = vector.extract_strided_slice %5 {offsets = [32, 0], sizes = [16, 128], strides = [1, 1]} : vector<128x128xf32> to vector<16x128xf32>
    %10 = arith.maximumf %8, %9 : vector<16x128xf32>
    %11 = vector.extract_strided_slice %5 {offsets = [48, 0], sizes = [16, 128], strides = [1, 1]} : vector<128x128xf32> to vector<16x128xf32>
    %12 = arith.maximumf %10, %11 : vector<16x128xf32>
    %13 = vector.extract_strided_slice %5 {offsets = [64, 0], sizes = [16, 128], strides = [1, 1]} : vector<128x128xf32> to vector<16x128xf32>
    %14 = arith.maximumf %12, %13 : vector<16x128xf32>
    %15 = vector.extract_strided_slice %5 {offsets = [80, 0], sizes = [16, 128], strides = [1, 1]} : vector<128x128xf32> to vector<16x128xf32>
    %16 = arith.maximumf %14, %15 : vector<16x128xf32>
    %17 = vector.extract_strided_slice %5 {offsets = [96, 0], sizes = [16, 128], strides = [1, 1]} : vector<128x128xf32> to vector<16x128xf32>
    %18 = arith.maximumf %16, %17 : vector<16x128xf32>
    %19 = vector.extract_strided_slice %5 {offsets = [112, 0], sizes = [16, 128], strides = [1, 1]} : vector<128x128xf32> to vector<16x128xf32>
    %20 = arith.maximumf %18, %19 : vector<16x128xf32>
    %c0_5 = arith.constant 0 : index
    %c0_6 = arith.constant 0 : index
    %21 = vector.load %arg6[%c0_5, %c0_6] : memref<1x128xf32, #tpu.memory_space<vmem>>, vector<1x128xf32>
    %22 = vector.broadcast %21 : vector<1x128xf32> to vector<16x128xf32>
    %23 = arith.addf %20, %22 : vector<16x128xf32>
    %cst_7 = arith.constant 0.000000e+00 : f32
    %24 = vector.broadcast %cst_7 : f32 to vector<16x128xf32>
    %25 = arith.maximumf %23, %24 : vector<16x128xf32>
    %c0_8 = arith.constant 0 : index
    %c0_9 = arith.constant 0 : index
    %c0_10 = arith.constant 0 : index
    %26 = vector.load %arg7[%c0_8, %c0_9, %c0_10] : memref<1x16x128xf32, #tpu.memory_space<vmem>>, vector<1x16x128xf32>
    %27 = vector.shape_cast %26 : vector<1x16x128xf32> to vector<16x128xf32>
    %28 = vector.shape_cast %25 : vector<16x128xf32> to vector<1x16x128xf32>
    tpu.vector_store %arg7[%c0_8, %c0_9, %c0_10], %28 {strides = array<i32>} : memref<1x16x128xf32, #tpu.memory_space<vmem>>, vector<1x16x128xf32>,
    return
  }
  func.func @transform_0(%arg0: i32, %arg1: i32, %arg2: memref<4x128xi32, #tpu.memory_space<smem>>) -> (i32, i32, i32) {
    %c0_i32 = arith.constant 0 : i32
    %c0_i32_0 = arith.constant 0 : i32
    %c0_i32_1 = arith.constant 0 : i32
    return %arg0, %c0_i32, %c0_i32_0 : i32, i32, i32
  }
  func.func @transform_1(%arg0: i32, %arg1: i32, %arg2: memref<4x128xi32, #tpu.memory_space<smem>>) -> (i32, i32, i32) {
    %c0_i32 = arith.constant 0 : i32
    %c0_i32_0 = arith.constant 0 : i32
    %c0_i32_1 = arith.constant 0 : i32
    return %arg0, %c0_i32, %c0_i32_0 : i32, i32, i32
  }
  func.func @transform_2(%arg0: i32, %arg1: i32, %arg2: memref<4x128xi32, #tpu.memory_space<smem>>) -> (i32, i32) {
    %c0_i32 = arith.constant 0 : i32
    %c0_i32_0 = arith.constant 0 : i32
    %c0_i32_1 = arith.constant 0 : i32
    return %c0_i32, %c0_i32_0 : i32, i32
  }
  func.func @transform_3(%arg0: i32, %arg1: i32, %arg2: memref<4x128xi32, #tpu.memory_space<smem>>) -> (i32, i32) {
    %c0_i32 = arith.constant 0 : i32
    %c0_i32_0 = arith.constant 0 : i32
    %c0_i32_1 = arith.constant 0 : i32
    return %c0_i32, %c0_i32_0 : i32, i32
  }
  func.func @transform_4(%arg0: i32, %arg1: i32, %arg2: memref<4x128xi32, #tpu.memory_space<smem>>) -> (i32, i32, i32) {
    %c0_i32 = arith.constant 0 : i32
    %c0_i32_0 = arith.constant 0 : i32
    return %arg0, %arg1, %c0_i32 : i32, i32, i32
  }
}

</mosaic_0001>

<llo_original>
// kernel: tpu_custom_call.1
$region0: #{tpu_custom_call.1}
  #allocation0 [shape = 'u32[]', space=smem, size = 0x4, offset = 0x4, fixed_abs, tag = 'smem constant byte address 0x4 - core index']
  #allocation1 [shape = 'u32[72,128]{1,0:T(1,128)}', space=vmem, size = 0x9000, scoped, tag = 'internal scratch']
  #allocation2 [shape = 'f32[128,8]{1,0:T(8,128)}', space=vmem, size = 0x10000, scoped, tag = 'scratch operand']
  #allocation3 [shape = 's32[1]{0}', space=sflag, size = 0x4, scoped, tag = 'scoped memory for tpu_custom_call.1']
  #allocation4 [shape = 'u8[2048]{0}', space=smem, size = 0x800, scoped, tag = 'prefetched SMEM operand 0']
  %s0 = inlined_call_operand.vmem [shape: s32[4,128], index: 0, kind: input, shape index: {}]
  %s1 = inlined_call_operand.vmem [shape: f32[2,16,4], index: 1, kind: input, shape index: {}]
  %s2 = inlined_call_operand.vmem [shape: f32[2,16,4], index: 2, kind: input, shape index: {}]
  %s3 = inlined_call_operand.vmem [shape: bf16[8,128], index: 3, kind: input, shape index: {}]
  %s4 = inlined_call_operand.vmem [shape: f32[1,128], index: 4, kind: input, shape index: {}]
  %s5 = inlined_call_operand.hbm [shape: f32[2,16,128], index: 5, kind: output, shape index: {}]
  %s6 = sld [smem:[#allocation0]]
  $region56: #{tpu_custom_call.1} parent=0
    _
  %s8 = ssub.s32 1, %s6
  %s9 = scalar_select 0, %s8, %s6
  %s11 = sshll.u32 %s0, 4
  %s12 = int_to_ptr.vmem [resolvable:$true] %s11
  %14 = dma.vmem_to_smem %s12, 64, [#allocation4], [#allocation3]
  %16 = dma.done [#allocation3], 64
  %17 = sfence
  $region1: #{tpu_custom_call.1} parent=0
    #allocation5 [shape = 'u8[16384]{0}', space=vmem, size = 0x4000, scoped, tag = 'output window, operand 0']
    #allocation6 [shape = 's32[2]{0}', space=sflag, size = 0x8, scoped, tag = 'scoped memory for tpu_custom_call.1']
    %18 = vsyncpa [#allocation6], 0
    %s19 = scalar_lea.sflag [#allocation6], 1
    %20 = vsyncpa %s19, 0
    loop: start=0, step=1, limit=4
    $region2: #{tpu_custom_call.1} parent=1 // loop_pre_header
      _
    $region3: #{tpu_custom_call.1} parent=1 // loop_header
      %s22 = sphi 0, %s26
      %p23 = scmp.ge.s32.totalorder %s22, 4
      %s29 = sphi 0, %s41
      %s30 = sphi 0, %s37
      %s31 = sphi 0, %s29
      %s32 = sphi 0, %s30
      %s33 = sphi 0, %s31
      %s34 = sphi 0, %s32
      %s44 = sphi 0, %s46
      %s47 = sphi 0, %s44
      %s48 = sphi 0, %s47
      %s64 = sphi 0, %s48
      %s70 = sphi 0, %s72
      %s73 = sphi 0, %s70
      %s74 = sphi 0, %s73
      %s90 = sphi 0, %s74
      %s94 = sphi 0, %s94
      %s96 = sphi 0, %s94
      %s97 = sphi 0, %s96
      %s111 = sphi 0, %s97
      %s115 = sphi 0, %s115
      %s117 = sphi 0, %s115
      %s118 = sphi 0, %s117
      %s132 = sphi 0, %s118
      %s140 = sphi 0, %s142
      %s143 = sphi 0, %s140
      %s144 = sphi 0, %s143
      %s160 = sphi 0, %s144
    $region4: #{tpu_custom_call.1} parent=1 // loop_header_branch
      %25 = sbr.rel (%p23) target = $region8
    $region5: #{tpu_custom_call.1} parent=1 // loop_body
      %s27 = ssub.s32 %s22, 1
      %s28 = ssub.s32 %s22, 2
      %s35 = sadd.s32 1, %s30
      %p36 = scmp.ge.s32.totalorder %s35, 1
      %s37 = scalar_select %p36, 0, %s35
      %s38 = sadd.s32 1, %s29
      %s39 = scalar_select %p36, %s38, %s29
      %p40 = scmp.ge.s32.totalorder %s39, 2
      %s41 = scalar_select %p40, 0, %s39
      %s42 = ssub.s32 %s29, %s41
      %p43 = scmp.eq.s32.totalorder %s42, 0
      %s45 = sadd.s32 %s44, 1
      %s46 = scalar_select %p43, %s44, %s45
      %p49 = pneg %p43
      %p50 = scmp.eq.s32.totalorder %s22, 1
      %p51 = por %p49, %p50
      %p52 = scmp.ne.s32.totalorder %s44, %s47
      %p53 = scmp.eq.s32.totalorder %s22, 0
      %p54 = por %p52, %p53
      %p55 = scmp.ne.s32.totalorder %s44, %s47
      %p56 = scmp.eq.s32.totalorder %s27, 1
      %p57 = por %p55, %p56
      %p58 = scmp.ne.s32.totalorder %s47, %s48
      %p59 = scmp.eq.s32.totalorder %s27, 0
      %p60 = por %p58, %p59
      %p61 = scmp.ne.s32.totalorder %s47, %s48
      %p62 = scmp.eq.s32.totalorder %s28, 1
      %p63 = por %p61, %p62
      %p65 = scmp.ne.s32.totalorder %s48, %s64
      %p66 = scmp.eq.s32.totalorder %s28, 0
      %p67 = por %p65, %p66
      %s68 = ssub.s32 %s29, %s41
      %p69 = scmp.eq.s32.totalorder %s68, 0
      %s71 = sadd.s32 %s70, 1
      %s72 = scalar_select %p69, %s70, %s71
      %p75 = pneg %p69
      %p76 = scmp.eq.s32.totalorder %s22, 1
      %p77 = por %p75, %p76
      %p78 = scmp.ne.s32.totalorder %s70, %s73
      %p79 = scmp.eq.s32.totalorder %s22, 0
      %p80 = por %p78, %p79
      %p81 = scmp.ne.s32.totalorder %s70, %s73
      %p82 = scmp.eq.s32.totalorder %s27, 1
      %p83 = por %p81, %p82
      %p84 = scmp.ne.s32.totalorder %s73, %s74
      %p85 = scmp.eq.s32.totalorder %s27, 0
      %p86 = por %p84, %p85
      %p87 = scmp.ne.s32.totalorder %s73, %s74
      %p88 = scmp.eq.s32.totalorder %s28, 1
      %p89 = por %p87, %p88
      %p91 = scmp.ne.s32.totalorder %s74, %s90
      %p92 = scmp.eq.s32.totalorder %s28, 0
      %p93 = por %p91, %p92
      %s95 = sadd.s32 %s94, 1
      %p98 = scmp.eq.s32.totalorder %s22, 1
      %p99 = scmp.ne.s32.totalorder %s94, %s96
      %p100 = scmp.eq.s32.totalorder %s22, 0
      %p101 = por %p99, %p100
      %p102 = scmp.ne.s32.totalorder %s94, %s96
      %p103 = scmp.eq.s32.totalorder %s27, 1
      %p104 = por %p102, %p103
      %p105 = scmp.ne.s32.totalorder %s96, %s97
      %p106 = scmp.eq.s32.totalorder %s27, 0
      %p107 = por %p105, %p106
      %p108 = scmp.ne.s32.totalorder %s96, %s97
      %p109 = scmp.eq.s32.totalorder %s28, 1
      %p110 = por %p108, %p109
      %p112 = scmp.ne.s32.totalorder %s97, %s111
      %p113 = scmp.eq.s32.totalorder %s28, 0
      %p114 = por %p112, %p113
      %s116 = sadd.s32 %s115, 1
      %p119 = scmp.eq.s32.totalorder %s22, 1
      %p120 = scmp.ne.s32.totalorder %s115, %s117
      %p121 = scmp.eq.s32.totalorder %s22, 0
      %p122 = por %p120, %p121
      %p123 = scmp.ne.s32.totalorder %s115, %s117
      %p124 = scmp.eq.s32.totalorder %s27, 1
      %p125 = por %p123, %p124
      %p126 = scmp.ne.s32.totalorder %s117, %s118
      %p127 = scmp.eq.s32.totalorder %s27, 0
      %p128 = por %p126, %p127
      %p129 = scmp.ne.s32.totalorder %s117, %s118
      %p130 = scmp.eq.s32.totalorder %s28, 1
      %p131 = por %p129, %p130
      %p133 = scmp.ne.s32.totalorder %s118, %s132
      %p134 = scmp.eq.s32.totalorder %s28, 0
      %p135 = por %p133, %p134
      %s136 = ssub.s32 %s29, %s41
      %s137 = ssub.s32 %s30, %s37
      %s138 = sor.u32 %s136, %s137
      %p139 = scmp.eq.s32.totalorder %s138, 0
      %s141 = sadd.s32 %s140, 1
      %s142 = scalar_select %p139, %s140, %s141
      %p145 = pneg %p139
      %p146 = scmp.eq.s32.totalorder %s22, 1
      %p147 = por %p145, %p146
      %p148 = scmp.ne.s32.totalorder %s140, %s143
      %p149 = scmp.eq.s32.totalorder %s22, 0
      %p150 = por %p148, %p149
      %p151 = scmp.ne.s32.totalorder %s140, %s143
      %p152 = scmp.eq.s32.totalorder %s27, 1
      %p153 = por %p151, %p152
      %p154 = scmp.ne.s32.totalorder %s143, %s144
      %p155 = scmp.eq.s32.totalorder %s27, 0
      %p156 = por %p154, %p155
      %p157 = scmp.ne.s32.totalorder %s143, %s144
      %p158 = scmp.eq.s32.totalorder %s28, 1
      %p159 = por %p157, %p158
      %p161 = scmp.ne.s32.totalorder %s144, %s160
      %p162 = scmp.eq.s32.totalorder %s28, 0
      %p163 = por %p161, %p162
      %p164 = scmp.le.s32.totalorder 1, %s22
      %p165 = scmp.lt.s32.totalorder %s22, 3
      %p166 = pnand %p164, %p165
      %p167 = pneg %p166
      // Predicated region
      $region9: #{tpu_custom_call.1} parent=5 // pred_check
        _
      $region10: #{tpu_custom_call.1} parent=5 // pred_check_branch
        %169 = sbr.rel (%p166) target = $region12
      $region11: #{tpu_custom_call.1} parent=5 // pred_region
        %s170 = ssub.s32 %s22, 1
        // Predicated region
        $region13: #{tpu_custom_call.1} parent=11 // pred_check
          %p171 = pneg %p107
        $region14: #{tpu_custom_call.1} parent=11 // pred_check_branch
          %173 = sbr.rel (%p171) target = $region16
        $region15: #{tpu_custom_call.1} parent=11 // pred_region
          _
        $region16: #{tpu_custom_call.1} parent=11 // pred_fallthru
          _
        // Predicated region
        $region17: #{tpu_custom_call.1} parent=11 // pred_check
          %p174 = pneg %p128
        $region18: #{tpu_custom_call.1} parent=11 // pred_check_branch
          %176 = sbr.rel (%p174) target = $region20
        $region19: #{tpu_custom_call.1} parent=11 // pred_region
          _
        $region20: #{tpu_custom_call.1} parent=11 // pred_fallthru
          _
      $region12: #{tpu_custom_call.1} parent=5 // pred_fallthru
        _
      %p177 = scmp.lt.s32.totalorder %s22, 2
      // Predicated region
      $region21: #{tpu_custom_call.1} parent=5 // pred_check
        %p178 = pneg %p177
      $region22: #{tpu_custom_call.1} parent=5 // pred_check_branch
        %180 = sbr.rel (%p178) target = $region24
      $region23: #{tpu_custom_call.1} parent=5 // pred_region
        // Predicated region
        $region25: #{tpu_custom_call.1} parent=23 // pred_check
          %p181 = pneg %p54
        $region26: #{tpu_custom_call.1} parent=23 // pred_check_branch
          %183 = sbr.rel (%p181) target = $region28
        $region27: #{tpu_custom_call.1} parent=23 // pred_region
          %p184 = scmp.lt.s32.totalorder %s29, 1
          %s185 = scalar_select %p184, %s29, 1
          %s186 = smul.addr %s185, 2
          %s187 = smul.addr %s186, 8
          %s188 = scalar_lea.vmem %s1, %s187
        $region28: #{tpu_custom_call.1} parent=23 // pred_fallthru
          _
        // Predicated region
        $region29: #{tpu_custom_call.1} parent=23 // pred_check
          %p189 = pneg %p80
        $region30: #{tpu_custom_call.1} parent=23 // pred_check_branch
          %191 = sbr.rel (%p189) target = $region32
        $region31: #{tpu_custom_call.1} parent=23 // pred_region
          %p192 = scmp.lt.s32.totalorder %s29, 1
          %s193 = scalar_select %p192, %s29, 1
          %s194 = smul.addr %s193, 2
          %s195 = smul.addr %s194, 8
          %s196 = scalar_lea.vmem %s2, %s195
        $region32: #{tpu_custom_call.1} parent=23 // pred_fallthru
          _
      $region24: #{tpu_custom_call.1} parent=5 // pred_fallthru
        _
      %p197 = scmp.le.s32.totalorder 1, %s22
      %p198 = scmp.lt.s32.totalorder %s22, 3
      %p199 = pnand %p197, %p198
      %p200 = pneg %p199
      // Predicated region
      $region33: #{tpu_custom_call.1} parent=5 // pred_check
        _
      $region34: #{tpu_custom_call.1} parent=5 // pred_check_branch
        %202 = sbr.rel (%p199) target = $region36
      $region35: #{tpu_custom_call.1} parent=5 // pred_region
        %s203 = ssub.s32 %s22, 1
        %p204 = scmp.lt.s32.totalorder %s31, 1
        %s205 = scalar_select %p204, %s31, 1
        %s206 = smul.addr %s205, 2
        %s207 = smul.addr %s206, 8
        %s208 = scalar_lea.vmem %s1, %s207
        %p209 = pneg %p60
        %p210 = pneg %p57
        %p211 = scmp.lt.s32.totalorder %s31, 1
        %s212 = scalar_select %p211, %s31, 1
        %s213 = smul.addr %s212, 2
        %s214 = smul.addr %s213, 8
        %s215 = scalar_lea.vmem %s2, %s214
        %p216 = pneg %p86
        %p217 = pneg %p83
        %p218 = pneg %p107
        %p219 = pneg %p104
        %p220 = pneg %p128
        %p221 = pneg %p125
        %p222 = pneg %p156
        %p223 = pneg %p153
        %s224 = sand.u32 %s143, 1
        %s225 = scalar_lea.sflag [#allocation6], %s224
        %s226 = sand.u32 %s143, 1
        %s227 = smul.addr %s226, 16
        %s228 = scalar_lea.vmem [#allocation5], %s227
        %p229 = scmp.lt.s32.totalorder %s31, 1
        %s230 = scalar_select %p229, %s31, 1
        %s231 = smul.addr %s230, 2
        %s232 = smul.addr %s231, 8
        %s233 = scalar_lea.vmem %s1, %s232
        %p234 = scmp.lt.s32.totalorder %s31, 1
        %s235 = scalar_select %p234, %s31, 1
        %s236 = smul.addr %s235, 2
        %s237 = smul.addr %s236, 8
        %s238 = scalar_lea.vmem %s2, %s237
        %s239 = smul.u32 2, %s32
        %s241 = smul.u32 %s32, 16
        loop: start=0, step=1, limit=16
        $region37: #{tpu_custom_call.1} parent=35 // loop_pre_header
          _
        $region38: #{tpu_custom_call.1} parent=35 // loop_header
          %s243 = sphi 0, %s247
          %p244 = scmp.ge.s32.totalorder %s243, 16
        $region39: #{tpu_custom_call.1} parent=35 // loop_header_branch
          %246 = sbr.rel (%p244) target = $region43
        $region40: #{tpu_custom_call.1} parent=35 // loop_body
          %s248 = sadd.s32 %s241, %s243
          %p249 = scmp.lt.s32.totalorder %s248, 15
          %s250 = scalar_select %p249, %s248, 15
          %s251 = smul.u32 %s250, 8
          %s252 = sshra.s32 %s251, 7
          %s253 = sand.u32 %s251, 127
          %s254 = sadd.s32 %s252, %s31
          %s255 = smul.u32 %s254, 128
          %s256 = sshra.s32 %s251, 7
          %s257 = sand.u32 %s251, 127
          %s258 = sadd.s32 %s255, %s257
          %s259 = sld [smem:[#allocation4 + %s258]]
          %s260 = sadd.s32 %s31, 2
          %s261 = sadd.s32 %s252, %s260
          %s262 = smul.u32 %s261, 128
          %s263 = sadd.s32 %s262, %s257
          %s264 = sld [smem:[#allocation4 + %s263]]
          %s265 = scalar_lea.vmem %s233, %s264
          %v266 = vld [vmem:[%s265] sm:$0x1]
          %s267 = scalar_lea.vmem [#allocation2], %s243
          %vm268 = vcmask 24576
          %269 = vst.msk [vmem:[%s267] sm:$0x1] %vm268, %v266
          %s270 = scalar_lea.vmem %s238, %s259
          %v271 = vld [vmem:[%s270] sm:$0x1]
          %273 = vrot.lane.b32.xlu0 %v271, 4
          %v274 = vpop.permute.xlu0 %273
          %vm276 = vcmask 57376
          %277 = vst.msk [vmem:[%s267] sm:$0x1] %vm276, %v274
          %s278 = sadd.s32 %s251, 1
          %s279 = sshra.s32 %s278, 7
          %s280 = sand.u32 %s278, 127
          %s281 = sadd.s32 %s279, %s31
          %s282 = smul.u32 %s281, 128
          %s283 = sshra.s32 %s278, 7
          %s284 = sand.u32 %s278, 127
          %s285 = sadd.s32 %s282, %s284
          %s286 = sld [smem:[#allocation4 + %s285]]
          %s287 = sadd.s32 %s279, %s260
          %s288 = smul.u32 %s287, 128
          %s289 = sadd.s32 %s288, %s284
          %s290 = sld [smem:[#allocation4 + %s289]]
          %s291 = sadd.s32 %s243, 16
          %s292 = scalar_lea.vmem %s233, %s290
          %v293 = vld [vmem:[%s292] sm:$0x1]
          %s294 = scalar_lea.vmem [#allocation2], %s291
          %295 = vst.msk [vmem:[%s294] sm:$0x1] %vm268, %v293
          %s296 = scalar_lea.vmem %s238, %s286
          %v297 = vld [vmem:[%s296] sm:$0x1]
          %299 = vrot.lane.b32.xlu0 %v297, 4
          %v300 = vpop.permute.xlu0 %299
          %302 = vst.msk [vmem:[%s294] sm:$0x1] %vm276, %v300
          %s303 = sadd.s32 %s251, 2
          %s304 = sshra.s32 %s303, 7
          %s305 = sand.u32 %s303, 127
          %s306 = sadd.s32 %s304, %s31
          %s307 = smul.u32 %s306, 128
          %s308 = sshra.s32 %s303, 7
          %s309 = sand.u32 %s303, 127
          %s310 = sadd.s32 %s307, %s309
          %s311 = sld [smem:[#allocation4 + %s310]]
          %s312 = sadd.s32 %s304, %s260
          %s313 = smul.u32 %s312, 128
          %s314 = sadd.s32 %s313, %s309
          %s315 = sld [smem:[#allocation4 + %s314]]
          %s316 = sadd.s32 %s243, 32
          %s317 = scalar_lea.vmem %s233, %s315
          %v318 = vld [vmem:[%s317] sm:$0x1]
          %s319 = scalar_lea.vmem [#allocation2], %s316
          %320 = vst.msk [vmem:[%s319] sm:$0x1] %vm268, %v318
          %s321 = scalar_lea.vmem %s238, %s311
          %v322 = vld [vmem:[%s321] sm:$0x1]
          %324 = vrot.lane.b32.xlu0 %v322, 4
          %v325 = vpop.permute.xlu0 %324
          %327 = vst.msk [vmem:[%s319] sm:$0x1] %vm276, %v325
          %s328 = sadd.s32 %s251, 3
          %s329 = sshra.s32 %s328, 7
          %s330 = sand.u32 %s328, 127
          %s331 = sadd.s32 %s329, %s31
          %s332 = smul.u32 %s331, 128
          %s333 = sshra.s32 %s328, 7
          %s334 = sand.u32 %s328, 127
          %s335 = sadd.s32 %s332, %s334
          %s336 = sld [smem:[#allocation4 + %s335]]
          %s337 = sadd.s32 %s329, %s260
          %s338 = smul.u32 %s337, 128
          %s339 = sadd.s32 %s338, %s334
          %s340 = sld [smem:[#allocation4 + %s339]]
          %s341 = sadd.s32 %s243, 48
          %s342 = scalar_lea.vmem %s233, %s340
          %v343 = vld [vmem:[%s342] sm:$0x1]
          %s344 = scalar_lea.vmem [#allocation2], %s341
          %345 = vst.msk [vmem:[%s344] sm:$0x1] %vm268, %v343
          %s346 = scalar_lea.vmem %s238, %s336
          %v347 = vld [vmem:[%s346] sm:$0x1]
          %349 = vrot.lane.b32.xlu0 %v347, 4
          %v350 = vpop.permute.xlu0 %349
          %352 = vst.msk [vmem:[%s344] sm:$0x1] %vm276, %v350
          %s353 = sadd.s32 %s251, 4
          %s354 = sshra.s32 %s353, 7
          %s355 = sand.u32 %s353, 127
          %s356 = sadd.s32 %s354, %s31
          %s357 = smul.u32 %s356, 128
          %s358 = sshra.s32 %s353, 7
          %s359 = sand.u32 %s353, 127
          %s360 = sadd.s32 %s357, %s359
          %s361 = sld [smem:[#allocation4 + %s360]]
          %s362 = sadd.s32 %s354, %s260
          %s363 = smul.u32 %s362, 128
          %s364 = sadd.s32 %s363, %s359
          %s365 = sld [smem:[#allocation4 + %s364]]
          %s366 = sadd.s32 %s243, 64
          %s367 = scalar_lea.vmem %s233, %s365
          %v368 = vld [vmem:[%s367] sm:$0x1]
          %s369 = scalar_lea.vmem [#allocation2], %s366
          %370 = vst.msk [vmem:[%s369] sm:$0x1] %vm268, %v368
          %s371 = scalar_lea.vmem %s238, %s361
          %v372 = vld [vmem:[%s371] sm:$0x1]
          %374 = vrot.lane.b32.xlu0 %v372, 4
          %v375 = vpop.permute.xlu0 %374
          %377 = vst.msk [vmem:[%s369] sm:$0x1] %vm276, %v375
          %s378 = sadd.s32 %s251, 5
          %s379 = sshra.s32 %s378, 7
          %s380 = sand.u32 %s378, 127
          %s381 = sadd.s32 %s379, %s31
          %s382 = smul.u32 %s381, 128
          %s383 = sshra.s32 %s378, 7
          %s384 = sand.u32 %s378, 127
          %s385 = sadd.s32 %s382, %s384
          %s386 = sld [smem:[#allocation4 + %s385]]
          %s387 = sadd.s32 %s379, %s260
          %s388 = smul.u32 %s387, 128
          %s389 = sadd.s32 %s388, %s384
          %s390 = sld [smem:[#allocation4 + %s389]]
          %s391 = sadd.s32 %s243, 80
          %s392 = scalar_lea.vmem %s233, %s390
          %v393 = vld [vmem:[%s392] sm:$0x1]
          %s394 = scalar_lea.vmem [#allocation2], %s391
          %395 = vst.msk [vmem:[%s394] sm:$0x1] %vm268, %v393
          %s396 = scalar_lea.vmem %s238, %s386
          %v397 = vld [vmem:[%s396] sm:$0x1]
          %399 = vrot.lane.b32.xlu0 %v397, 4
          %v400 = vpop.permute.xlu0 %399
          %402 = vst.msk [vmem:[%s394] sm:$0x1] %vm276, %v400
          %s403 = sadd.s32 %s251, 6
          %s404 = sshra.s32 %s403, 7
          %s405 = sand.u32 %s403, 127
          %s406 = sadd.s32 %s404, %s31
          %s407 = smul.u32 %s406, 128
          %s408 = sshra.s32 %s403, 7
          %s409 = sand.u32 %s403, 127
          %s410 = sadd.s32 %s407, %s409
          %s411 = sld [smem:[#allocation4 + %s410]]
          %s412 = sadd.s32 %s404, %s260
          %s413 = smul.u32 %s412, 128
          %s414 = sadd.s32 %s413, %s409
          %s415 = sld [smem:[#allocation4 + %s414]]
          %s416 = sadd.s32 %s243, 96
          %s417 = scalar_lea.vmem %s233, %s415
          %v418 = vld [vmem:[%s417] sm:$0x1]
          %s419 = scalar_lea.vmem [#allocation2], %s416
          %420 = vst.msk [vmem:[%s419] sm:$0x1] %vm268, %v418
          %s421 = scalar_lea.vmem %s238, %s411
          %v422 = vld [vmem:[%s421] sm:$0x1]
          %424 = vrot.lane.b32.xlu0 %v422, 4
          %v425 = vpop.permute.xlu0 %424
          %427 = vst.msk [vmem:[%s419] sm:$0x1] %vm276, %v425
          %s428 = sadd.s32 %s251, 7
          %s429 = sshra.s32 %s428, 7
          %s430 = sand.u32 %s428, 127
          %s431 = sadd.s32 %s429, %s31
          %s432 = smul.u32 %s431, 128
          %s433 = sshra.s32 %s428, 7
          %s434 = sand.u32 %s428, 127
          %s435 = sadd.s32 %s432, %s434
          %s436 = sld [smem:[#allocation4 + %s435]]
          %s437 = sadd.s32 %s429, %s260
          %s438 = smul.u32 %s437, 128
          %s439 = sadd.s32 %s438, %s434
          %s440 = sld [smem:[#allocation4 + %s439]]
          %s441 = sadd.s32 %s243, 112
          %s442 = scalar_lea.vmem %s233, %s440
          %v443 = vld [vmem:[%s442] sm:$0x1]
          %s444 = scalar_lea.vmem [#allocation2], %s441
          %445 = vst.msk [vmem:[%s444] sm:$0x1] %vm268, %v443
          %s446 = scalar_lea.vmem %s238, %s436
          %v447 = vld [vmem:[%s446] sm:$0x1]
          %449 = vrot.lane.b32.xlu0 %v447, 4
          %v450 = vpop.permute.xlu0 %449
          %452 = vst.msk [vmem:[%s444] sm:$0x1] %vm276, %v450
        $region41: #{tpu_custom_call.1} parent=35 // loop_footer
          %s247 = sadd.s32 1, %s243
        $region42: #{tpu_custom_call.1} parent=35 // loop_footer_branch
          %242 = sbr.rel target = $region38
        $region43: #{tpu_custom_call.1} parent=35 // loop_exit
          _
        %v453 = vld [vmem:[#allocation2] sm:$0xff]
        %v454 = vld [vmem:[#allocation2 + $0x8] sm:$0xff]
        %v455 = vld [vmem:[#allocation2 + $0x10] sm:$0xff]
        %v456 = vld [vmem:[#allocation2 + $0x18] sm:$0xff]
        %v457 = vld [vmem:[#allocation2 + $0x20] sm:$0xff]
        %v458 = vld [vmem:[#allocation2 + $0x28] sm:$0xff]
        %v459 = vld [vmem:[#allocation2 + $0x30] sm:$0xff]
        %v460 = vld [vmem:[#allocation2 + $0x38] sm:$0xff]
        %v461 = vld [vmem:[#allocation2 + $0x40] sm:$0xff]
        %v462 = vld [vmem:[#allocation2 + $0x48] sm:$0xff]
        %v463 = vld [vmem:[#allocation2 + $0x50] sm:$0xff]
        %v464 = vld [vmem:[#allocation2 + $0x58] sm:$0xff]
        %v465 = vld [vmem:[#allocation2 + $0x60] sm:$0xff]
        %v466 = vld [vmem:[#allocation2 + $0x68] sm:$0xff]
        %v467 = vld [vmem:[#allocation2 + $0x70] sm:$0xff]
        %v468 = vld [vmem:[#allocation2 + $0x78] sm:$0xff]
        %v469 = vpack.c.bf16 %v454, %v453
        %v470 = vpack.c.bf16 %v456, %v455
        %v471 = vpack.c.bf16 %v458, %v457
        %v472 = vpack.c.bf16 %v460, %v459
        %v473 = vpack.c.bf16 %v462, %v461
        %v474 = vpack.c.bf16 %v464, %v463
        %v475 = vpack.c.bf16 %v466, %v465
        %v476 = vpack.c.bf16 %v468, %v467
        %v477 = vld [vmem:[%s3] sm:$0xf]
        %vm478 = vcmask 64512
        %v480 = vsel %vm478, %v469, 0
        %v483 = vsel %vm478, %v470, 0
        %v486 = vsel %vm478, %v471, 0
        %v489 = vsel %vm478, %v472, 0
        %v492 = vsel %vm478, %v473, 0
        %v495 = vsel %vm478, %v474, 0
        %v498 = vsel %vm478, %v475, 0
        %v501 = vsel %vm478, %v476, 0
        %vm503 = vcmask 1043456
        %v505 = vsel %vm503, %v477, 0
        %507 = vmatpush.bf16.msra.mxu0 0
        %508 = vmatpush.bf16.msra.mxu0 0
        %509 = vmatpush.bf16.msra.mxu0 0
        %510 = vmatpush.bf16.msra.mxu0 0
        %511 = vmatpush.bf16.msra.mxu0 0
        %512 = vmatpush.bf16.msra.mxu0 0
        %513 = vmatpush.bf16.msra.mxu0 0
        %514 = vmatpush.bf16.msra.mxu0 %v505
        %515 = vmatmul.bf16.gmra.mxu0 %v480
        %v516 = vpop.f32.mrf.mxu0
        %v517 = vadd.f32 0.0, %v516
        %v518 = vpop.f32.mrf.mxu0
        %v519 = vadd.f32 0.0, %v518
        %520 = vmatmul.bf16.gmra.mxu0 %v483
        %v521 = vpop.f32.mrf.mxu0
        %v522 = vadd.f32 0.0, %v521
        %v523 = vpop.f32.mrf.mxu0
        %v524 = vadd.f32 0.0, %v523
        %525 = vmatmul.bf16.gmra.mxu0 %v486
        %v526 = vpop.f32.mrf.mxu0
        %v527 = vadd.f32 0.0, %v526
        %v528 = vpop.f32.mrf.mxu0
        %v529 = vadd.f32 0.0, %v528
        %530 = vmatmul.bf16.gmra.mxu0 %v489
        %v531 = vpop.f32.mrf.mxu0
        %v532 = vadd.f32 0.0, %v531
        %v533 = vpop.f32.mrf.mxu0
        %v534 = vadd.f32 0.0, %v533
        %535 = vmatmul.bf16.gmra.mxu0 %v492
        %v536 = vpop.f32.mrf.mxu0
        %v537 = vadd.f32 0.0, %v536
        %v538 = vpop.f32.mrf.mxu0
        %v539 = vadd.f32 0.0, %v538
        %540 = vmatmul.bf16.gmra.mxu0 %v495
        %v541 = vpop.f32.mrf.mxu0
        %v542 = vadd.f32 0.0, %v541
        %v543 = vpop.f32.mrf.mxu0
        %v544 = vadd.f32 0.0, %v543
        %545 = vmatmul.bf16.gmra.mxu0 %v498
        %v546 = vpop.f32.mrf.mxu0
        %v547 = vadd.f32 0.0, %v546
        %v548 = vpop.f32.mrf.mxu0
        %v549 = vadd.f32 0.0, %v548
        %550 = vmatmul.bf16.gmra.mxu0 %v501
        %v551 = vpop.f32.mrf.mxu0
        %v552 = vadd.f32 0.0, %v551
        %v553 = vpop.f32.mrf.mxu0
        %v554 = vadd.f32 0.0, %v553
        %555 = vdwg.mxu0
        %v556 = vmax.f32 %v517, %v522
        %v557 = vmax.f32 %v519, %v524
        %v558 = vmax.f32 %v556, %v527
        %v559 = vmax.f32 %v557, %v529
        %v560 = vmax.f32 %v558, %v532
        %v561 = vmax.f32 %v559, %v534
        %v562 = vmax.f32 %v560, %v537
        %v563 = vmax.f32 %v561, %v539
        %v564 = vmax.f32 %v562, %v542
        %v565 = vmax.f32 %v563, %v544
        %v566 = vmax.f32 %v564, %v547
        %v567 = vmax.f32 %v565, %v549
        %v568 = vmax.f32 %v566, %v552
        %v569 = vmax.f32 %v567, %v554
        %v570 = vld [vmem:[%s4] sm:$0x1]
        %v572 = vperm.slane %v570, 0
        %v574 = vadd.f32 %v568, %v572
        %v575 = vadd.f32 %v569, %v572
        %v576 = vmax.f32 %v574, 0.0
        %v577 = vmax.f32 %v575, 0.0
        %578 = vst [vmem:[%s228] sm:$0xff] %v576
        %579 = vst [vmem:[%s228 + $0x8] sm:$0xff] %v577
        %s580 = sand.u32 %s143, 1
        %s581 = scalar_lea.sflag [#allocation6], %s580
        %s582 = sand.u32 %s143, 1
        %s583 = smul.addr %s582, 16
        %s584 = scalar_lea.vmem [#allocation5], %s583
        // Predicated region
        $region44: #{tpu_custom_call.1} parent=35 // pred_check
          %p585 = pneg %p153
        $region45: #{tpu_custom_call.1} parent=35 // pred_check_branch
          %587 = sbr.rel (%p585) target = $region47
        $region46: #{tpu_custom_call.1} parent=35 // pred_region
          %s588 = smul.u32 2, %s32
          %590 = vsyncadd %s581, 0
          %s591 = smul.addr %s31, 2
          %s592 = sadd.s32 %s588, %s591
          %s593 = smul.addr %s592, 8
          %s594 = scalar_lea.hbm %s5, %s593
          %s595 = sshll.u32 %s584, 4
          %s596 = int_to_ptr.vmem [resolvable:$true] %s595
          %s597 = sshll.u32 %s594, 4
          %s598 = int_to_ptr.hbm [resolvable:$true] %s597
          %603 = dma.vmem_to_hbm [thread:$0]  %s596, 256, %s598, %s581, 128, 128, 8
        $region47: #{tpu_custom_call.1} parent=35 // pred_fallthru
          _
      $region36: #{tpu_custom_call.1} parent=5 // pred_fallthru
        _
      %p604 = scmp.le.s32.totalorder 2, %s22
      // Predicated region
      $region48: #{tpu_custom_call.1} parent=5 // pred_check
        %p605 = pneg %p604
      $region49: #{tpu_custom_call.1} parent=5 // pred_check_branch
        %607 = sbr.rel (%p605) target = $region51
      $region50: #{tpu_custom_call.1} parent=5 // pred_region
        %s608 = ssub.s32 %s22, 2
        // Predicated region
        $region52: #{tpu_custom_call.1} parent=50 // pred_check
          %p609 = pneg %p159
        $region53: #{tpu_custom_call.1} parent=50 // pred_check_branch
          %611 = sbr.rel (%p609) target = $region55
        $region54: #{tpu_custom_call.1} parent=50 // pred_region
          %s612 = sand.u32 %s144, 1
          %s613 = scalar_lea.sflag [#allocation6], %s612
          %s614 = sand.u32 %s144, 1
          %s615 = smul.addr %s614, 16
          %s616 = scalar_lea.vmem [#allocation5], %s615
          %618 = dma.done %s613, 256
        $region55: #{tpu_custom_call.1} parent=50 // pred_fallthru
          _
      $region51: #{tpu_custom_call.1} parent=5 // pred_fallthru
        _
    $region6: #{tpu_custom_call.1} parent=1 // loop_footer
      %s26 = sadd.s32 1, %s22
    $region7: #{tpu_custom_call.1} parent=1 // loop_footer_branch
      %21 = sbr.rel target = $region3
    $region8: #{tpu_custom_call.1} parent=1 // loop_exit
      _
    %619 = vsyncpa [#allocation6], 1
    %s620 = scalar_lea.sflag [#allocation6], 1
    %621 = vsyncpa %s620, 1

</llo_original>
